<compile_context>
chip_gen: v5e
topology: v5e:2x2
jax: 0.10.0
libtpu: 0.0.40
codegen_flags: <defaults>
</compile_context>

<pallas_src>
import math
import jax
import jax.numpy as jnp
from jax.experimental import pallas as pl
from jax.experimental.pallas import tpu as pltpu


def _round_up(x, m):
    return (x + m - 1) // m * m


# ----------------------------------------------------------------------------
# Pallas kernel: fused 3-layer pointwise MLP (bias-free 1x1 convs) + ReLU
# Transposed dataflow: channels on sublanes, rows on lanes.
# ----------------------------------------------------------------------------
def _mlp_kernel(x_ref, w1_ref, w2_ref, w3_ref, o_ref):
    # x: (C0p, tile_m) bf16; weights pre-transposed (Cout, Cin) bf16.
    # MXU accumulates in f32; final ReLU'd f32 is stored lane-dense.
    h = jnp.dot(w1_ref[...], x_ref[...], preferred_element_type=jnp.float32)
    h = jnp.maximum(h, 0.0)
    h = jnp.dot(w2_ref[...], h.astype(jnp.bfloat16),
                preferred_element_type=jnp.float32)
    h = jnp.maximum(h, 0.0)
    h = jnp.dot(w3_ref[...], h.astype(jnp.bfloat16),
                preferred_element_type=jnp.float32)
    h = jnp.maximum(h, 0.0)
    o_ref[...] = h.astype(o_ref.dtype)     # (Cout, tile_m) f32, unmasked store


def _num_tensorcores():
    """Best-effort TensorCore count (2 on v7x, 1 on v5e/v6e)."""
    try:
        info = pltpu.get_tpu_info()
        for attr in ("num_cores", "core_count", "num_tensorcores"):
            n = getattr(info, attr, None)
            if n:
                return int(n)
    except Exception:
        pass
    return 1


def _choose_tile_m(pk, batch, tile_m):
    """Largest lane tile that fits; only force >=2 grid steps on 2-TC chips."""
    tile = max(128, min(_round_up(tile_m, 128), _round_up(pk, 128), 8192))
    cores = _num_tensorcores()
    if cores >= 2:
        while batch * pl.cdiv(_round_up(pk, 128), tile) < cores and tile > 128:
            tile = max(128, _round_up(tile // 2, 128))
    return tile


def fused_pointnet_mlp(x, w1t, w2t, w3t, *, tile_m=4096):
    """x: (B, C0p, PK) bf16, channels on sublanes / rows on lanes.
    w?t: bf16 (Cout, Cin), layer-1 Cin zero-padded to C0p.

    Returns (B, C3, PK_pad) float32 -- already NCHW-major, so reshaping to
    (B, C3, P, K) is free.
    """
    B, C0p, PK = x.shape
    C1, C2, C3 = w1t.shape[0], w2t.shape[0], w3t.shape[0]

    tile = _choose_tile_m(PK, B, tile_m)
    PK_pad = pl.cdiv(PK, tile) * tile
    if PK_pad != PK:
        # padded columns are zero -> MLP output stays zero -> sliced off later
        x = jnp.pad(x, ((0, 0), (0, 0), (0, PK_pad - PK)))
    steps = PK_pad // tile

    # Memory-bound cost hint (don't chase MXU utilization on 8/16/32-wide K).
    flops = 2 * B * PK_pad * (C0p * C1 + C1 * C2 + C2 * C3)
    w_bytes = (w1t.size + w2t.size + w3t.size) * 2
    bytes_accessed = x.size * 2 + B * C3 * PK_pad * 4 + w_bytes

    # VMEM budget: double-buffered bf16 input + f32 output tiles, f32
    # intermediates and their bf16 casts, plus the (tiny) weights.
    vmem_need = tile * (2 * (C0p * 2 + C3 * 4)
                        + (C1 + C2 + C3) * 4
                        + (C1 + C2) * 2) + w_bytes
    vmem_limit = int(min(32 << 20, max(16 << 20, 2 * vmem_need + (4 << 20))))

    return pl.pallas_call(
        _mlp_kernel,
        out_shape=jax.ShapeDtypeStruct((B, C3, PK_pad), jnp.float32),
        grid=(B, steps),
        in_specs=[
            pl.BlockSpec((None, C0p, tile), lambda b, i: (b, 0, i)),
            pl.BlockSpec((C1, C0p), lambda b, i: (0, 0)),
            pl.BlockSpec((C2, C1), lambda b, i: (0, 0)),
            pl.BlockSpec((C3, C2), lambda b, i: (0, 0)),
        ],
        out_specs=pl.BlockSpec((None, C3, tile), lambda b, i: (b, 0, i)),
        compiler_params=pltpu.CompilerParams(
            dimension_semantics=("parallel", "parallel"),
            vmem_limit_bytes=vmem_limit),
        cost_estimate=pl.CostEstimate(flops=flops, transcendentals=0,
                                      bytes_accessed=bytes_accessed),
    )(x, w1t, w2t, w3t)


# ----------------------------------------------------------------------------
# Glue: QueryDepthPoint-style neighborhood query + channels-first gather
# ----------------------------------------------------------------------------
# TODO(synk): exact CUDA QueryDepthPoint semantics (depth-window grouping)
# approximated with a Euclidean ball query + first-index padding.
def query_and_group(pc, new_pc, dist, nsample):
    """pc: (B,3,N), new_pc: (B,3,P) -> indices (B,P,K) int32, num (B,P) int32."""
    B, _, N = pc.shape
    d2 = jnp.sum((new_pc[:, :, :, None] - pc[:, :, None, :]) ** 2, axis=1)  # (B,P,N)
    within = d2 < (dist * dist)
    cnt = jnp.sum(within.astype(jnp.int32), axis=-1)                        # (B,P)
    key = jnp.where(within, jnp.arange(N, dtype=jnp.int32)[None, None, :], N)
    neg_top, _ = jax.lax.top_k(-key, nsample)            # nsample smallest indices
    sorted_idx = -neg_top                                                   # (B,P,K)
    first = jnp.where(cnt[..., None] > 0, sorted_idx[..., 0:1], 0)
    ar = jnp.arange(nsample, dtype=jnp.int32)[None, None, :]
    idx = jnp.where(ar < cnt[..., None], sorted_idx, first)
    idx = jnp.clip(idx, 0, N - 1).astype(jnp.int32)
    num = jnp.minimum(cnt, nsample)
    return idx, num


def gather_channels_first(x, idx_flat):
    """x: (B, C, N), idx_flat: (B, 1, P*K) -> (B, C, P*K)."""
    B, C, _ = x.shape
    return jnp.take_along_axis(x, jnp.broadcast_to(idx_flat, (B, C, idx_flat.shape[-1])),
                               axis=2)


# ----------------------------------------------------------------------------
# PointNetModule forward
# ----------------------------------------------------------------------------
class PointNetModuleJAX:
    def __init__(self, infea, mlp, dist, nsample, use_xyz=True, key=None):
        self.dist = float(dist)
        self.nsample = int(nsample)
        self.use_xyz = use_xyz
        self.use_feature = infea > 0
        c_in = (infea + 3) if use_xyz else infea
        self.c_in = c_in
        self.c_in_pad = _round_up(max(c_in, 1), 8)       # sublane multiple
        self.c_out = int(mlp[2])

        key = jax.random.PRNGKey(0) if key is None else key
        keys = jax.random.split(key, 3)
        dims = [c_in, mlp[0], mlp[1], mlp[2]]
        eps = 1e-5
        # BN(eval, fresh init): gamma=1, beta=0, mean=0, var=1 -> pure scale,
        # zero shift, so the fused conv stays bias-free.
        # TODO(synk): trained BN running stats / affine params would need a
        # folded bias term added to the kernel (and the valid mask moved
        # after the MLP).
        bn_scale = 1.0 / math.sqrt(1.0 + eps)
        self.weights_f32 = []
        for li in range(3):
            cin, cout = dims[li], dims[li + 1]
            w = jax.random.normal(keys[li], (cin, cout), jnp.float32) \
                * math.sqrt(2.0 / cin)                   # kaiming_normal
            self.weights_f32.append(w * bn_scale)

        # Pre-transposed bf16 weights (Cout, Cin); layer-1 Cin zero-padded to
        # match the zero-padded input channels.
        w1, w2, w3 = self.weights_f32
        w1t = jnp.zeros((dims[1], self.c_in_pad), jnp.float32).at[:, :c_in].set(w1.T)
        self.w1t = w1t.astype(jnp.bfloat16)
        self.w2t = w2.T.astype(jnp.bfloat16)
        self.w3t = w3.T.astype(jnp.bfloat16)

    def __call__(self, pc, feat, new_pc):
        B = pc.shape[0]
        P = new_pc.shape[2]
        K = self.nsample
        PK = P * K

        idx, num = query_and_group(pc, new_pc, self.dist, K)     # (B,P,K), (B,P)
        idx_flat = idx.reshape(B, 1, PK)

        # Channels-first gather (same structure as torch.gather on (B,C,N)),
        # so grouped data lands directly in the kernel's (channels, rows)
        # layout with no transpose.
        # TODO(synk): fuse the gather itself into the Pallas kernel via
        # PrefetchScalarGridSpec (scalar-prefetched idx) + manual
        # make_async_copy so the grouped tensor never hits HBM.
        parts = []
        if self.use_xyz:
            gpc = gather_channels_first(pc, idx_flat).reshape(B, 3, P, K)
            parts.append(gpc - new_pc[:, :, :, None])
        if self.use_feature:
            Cf = feat.shape[1]
            gft = gather_channels_first(feat, idx_flat).reshape(B, Cf, P, K)
            parts.append(gft)
        grouped = parts[0] if len(parts) == 1 else jnp.concatenate(parts, axis=1)

        # Zero invalid query rows here (XLA fuses it into the gather); with
        # bias-free layers this equals the module's post-MLP `* valid` mask.
        valid = (num > 0).astype(grouped.dtype)[:, None, :, None]
        grouped = grouped * valid

        x = grouped.reshape(B, self.c_in, PK)
        if self.c_in_pad != self.c_in:
            x = jnp.pad(x, ((0, 0), (0, self.c_in_pad - self.c_in), (0, 0)))
        x = x.astype(jnp.bfloat16)

        out = fused_pointnet_mlp(x, self.w1t, self.w2t, self.w3t, tile_m=4096)
        if out.shape[-1] != PK:                 # only if PK needed tile padding
            out = out[:, :, :PK]
        # Already NCHW-major and float32: reshape is free.
        return out.reshape(B, self.c_out, P, K)


# ----------------------------------------------------------------------------
if __name__ == "__main__":
    key = jax.random.PRNGKey(0)
    k_pc, k_feat, k_params = jax.random.split(key, 3)

    B, N, P, K = 2, 128, 32, 8
    INFEA = 4
    MLP = [16, 32, 64]
    DIST = 0.8

    pc = jax.random.normal(k_pc, (B, 3, N), jnp.float32)
    feat = jax.random.normal(k_feat, (B, INFEA, N), jnp.float32)
    new_pc = pc[:, :, :P]  # centers are a subset of the cloud

    module = PointNetModuleJAX(INFEA, MLP, DIST, K, use_xyz=True, key=k_params)
    fwd = jax.jit(module.__call__)
    out = jax.block_until_ready(fwd(pc, feat, new_pc))
    assert out.shape == (B, MLP[2], P, K), out.shape
    assert out.dtype == jnp.float32, out.dtype

    # ---- cross-check the Pallas hot path against plain JAX (same bf16 math) --
    idx, num = query_and_group(pc, new_pc, DIST, K)
    idxf = idx.reshape(B, 1, P * K)
    gpc = gather_channels_first(pc, idxf).reshape(B, 3, P, K) - new_pc[:, :, :, None]
    gft = gather_channels_first(feat, idxf).reshape(B, INFEA, P, K)
    grouped = jnp.concatenate([gpc, gft], axis=1)
    valid = (num > 0).astype(grouped.dtype)[:, None, :, None]
    grouped = grouped * valid
    x2d = jnp.transpose(grouped.reshape(B, INFEA + 3, P * K), (0, 2, 1))
    x2d = x2d.reshape(B * P * K, INFEA + 3).astype(jnp.bfloat16)

    h = x2d
    for w in module.weights_f32:
        h = jnp.maximum(jnp.dot(h.astype(jnp.bfloat16), w.astype(jnp.bfloat16),
                                preferred_element_type=jnp.float32), 0.0)
    ref = jnp.transpose(h.reshape(B, P, K, MLP[2]), (0, 3, 1, 2))

    err = float(jnp.max(jnp.abs(out - ref)))
    assert jnp.allclose(out, ref, atol=2e-3, rtol=2e-3), err

    print("KERNEL_OK")
</pallas_src>

<mosaic_0001>
module attributes {stable_mosaic.version = 11 : i64} {
  func.func @_mlp_kernel(%arg0: i32, %arg1: i32, %arg2: memref<1x8x256xbf16, #tpu.memory_space<vmem>>, %arg3: memref<16x8xbf16, #tpu.memory_space<vmem>>, %arg4: memref<32x16xbf16, #tpu.memory_space<vmem>>, %arg5: memref<64x32xbf16, #tpu.memory_space<vmem>>, %arg6: memref<1x64x256xf32, #tpu.memory_space<vmem>>) attributes {dimension_semantics = [#tpu.dimension_semantics<parallel>, #tpu.dimension_semantics<parallel>], iteration_bounds = array<i64: 2, 1>, scalar_prefetch = 0 : i64, scratch_operands = 0 : i64, tpu.core_type = #tpu.core_type<tc>, window_params = [{transform_indices = @transform_0, window_bounds = array<i64: 1, 8, 256>}, {pipeline_mode = #tpu.pipeline_mode<synchronous>, transform_indices = @transform_1, window_bounds = array<i64: 16, 8>}, {pipeline_mode = #tpu.pipeline_mode<synchronous>, transform_indices = @transform_2, window_bounds = array<i64: 32, 16>}, {pipeline_mode = #tpu.pipeline_mode<synchronous>, transform_indices = @transform_3, window_bounds = array<i64: 64, 32>}, {transform_indices = @transform_4, window_bounds = array<i64: 1, 64, 256>}]} {
    %c0 = arith.constant 0 : index
    %c0_0 = arith.constant 0 : index
    %0 = vector.load %arg3[%c0, %c0_0] : memref<16x8xbf16, #tpu.memory_space<vmem>>, vector<16x8xbf16>
    %c0_1 = arith.constant 0 : index
    %c0_2 = arith.constant 0 : index
    %c0_3 = arith.constant 0 : index
    %1 = vector.load %arg2[%c0_1, %c0_2, %c0_3] : memref<1x8x256xbf16, #tpu.memory_space<vmem>>, vector<1x8x256xbf16>
    %2 = vector.shape_cast %1 : vector<1x8x256xbf16> to vector<8x256xbf16>
    %cst = arith.constant dense<0.000000e+00> : vector<16x256xf32>
    %3 = tpu.matmul %0, %2, %cst {dimension_numbers = #tpu.dot_dimension_numbers<[1], [0], [0], [1], [0, 0, 1, 1], [], []>} : vector<16x8xbf16>, vector<8x256xbf16>, vector<16x256xf32> -> vector<16x256xf32>
    %cst_4 = arith.constant 0.000000e+00 : f32
    %4 = vector.broadcast %cst_4 : f32 to vector<16x256xf32>
    %5 = arith.maximumf %3, %4 : vector<16x256xf32>
    %c0_5 = arith.constant 0 : index
    %c0_6 = arith.constant 0 : index
    %6 = vector.load %arg4[%c0_5, %c0_6] : memref<32x16xbf16, #tpu.memory_space<vmem>>, vector<32x16xbf16>
    %7 = arith.truncf %5 : vector<16x256xf32> to vector<16x256xbf16>
    %cst_7 = arith.constant dense<0.000000e+00> : vector<32x256xf32>
    %8 = tpu.matmul %6, %7, %cst_7 {dimension_numbers = #tpu.dot_dimension_numbers<[1], [0], [0], [1], [0, 0, 1, 1], [], []>} : vector<32x16xbf16>, vector<16x256xbf16>, vector<32x256xf32> -> vector<32x256xf32>
    %cst_8 = arith.constant 0.000000e+00 : f32
    %9 = vector.broadcast %cst_8 : f32 to vector<32x256xf32>
    %10 = arith.maximumf %8, %9 : vector<32x256xf32>
    %c0_9 = arith.constant 0 : index
    %c0_10 = arith.constant 0 : index
    %11 = vector.load %arg5[%c0_9, %c0_10] : memref<64x32xbf16, #tpu.memory_space<vmem>>, vector<64x32xbf16>
    %12 = arith.truncf %10 : vector<32x256xf32> to vector<32x256xbf16>
    %cst_11 = arith.constant dense<0.000000e+00> : vector<64x256xf32>
    %13 = tpu.matmul %11, %12, %cst_11 {dimension_numbers = #tpu.dot_dimension_numbers<[1], [0], [0], [1], [0, 0, 1, 1], [], []>} : vector<64x32xbf16>, vector<32x256xbf16>, vector<64x256xf32> -> vector<64x256xf32>
    %cst_12 = arith.constant 0.000000e+00 : f32
    %14 = vector.broadcast %cst_12 : f32 to vector<64x256xf32>
    %15 = arith.maximumf %13, %14 : vector<64x256xf32>
    %c0_13 = arith.constant 0 : index
    %c0_14 = arith.constant 0 : index
    %c0_15 = arith.constant 0 : index
    %16 = vector.load %arg6[%c0_13, %c0_14, %c0_15] : memref<1x64x256xf32, #tpu.memory_space<vmem>>, vector<1x64x256xf32>
    %17 = vector.shape_cast %16 : vector<1x64x256xf32> to vector<64x256xf32>
    %18 = vector.shape_cast %15 : vector<64x256xf32> to vector<1x64x256xf32>
    tpu.vector_store %arg6[%c0_13, %c0_14, %c0_15], %18 {strides = array<i32>} : memref<1x64x256xf32, #tpu.memory_space<vmem>>, vector<1x64x256xf32>,
    return
  }
  func.func @transform_0(%arg0: i32, %arg1: i32) -> (i32, i32, i32) {
    %c0_i32 = arith.constant 0 : i32
    %c0_i32_0 = arith.constant 0 : i32
    return %arg0, %c0_i32, %arg1 : i32, i32, i32
  }
  func.func @transform_1(%arg0: i32, %arg1: i32) -> (i32, i32) {
    %c0_i32 = arith.constant 0 : i32
    %c0_i32_0 = arith.constant 0 : i32
    %c0_i32_1 = arith.constant 0 : i32
    return %c0_i32, %c0_i32_0 : i32, i32
  }
  func.func @transform_2(%arg0: i32, %arg1: i32) -> (i32, i32) {
    %c0_i32 = arith.constant 0 : i32
    %c0_i32_0 = arith.constant 0 : i32
    %c0_i32_1 = arith.constant 0 : i32
    return %c0_i32, %c0_i32_0 : i32, i32
  }
  func.func @transform_3(%arg0: i32, %arg1: i32) -> (i32, i32) {
    %c0_i32 = arith.constant 0 : i32
    %c0_i32_0 = arith.constant 0 : i32
    %c0_i32_1 = arith.constant 0 : i32
    return %c0_i32, %c0_i32_0 : i32, i32
  }
  func.func @transform_4(%arg0: i32, %arg1: i32) -> (i32, i32, i32) {
    %c0_i32 = arith.constant 0 : i32
    %c0_i32_0 = arith.constant 0 : i32
    return %arg0, %c0_i32, %arg1 : i32, i32, i32
  }
}

</mosaic_0001>

<llo_original>
// kernel: a_call__.1
$region0: #{a_call__.1}
  #allocation0 [shape = 'u32[]', space=smem, size = 0x4, offset = 0x4, fixed_abs, tag = 'smem constant byte address 0x4 - core index']
  #allocation1 [shape = 'u32[72,128]{1,0:T(1,128)}', space=vmem, size = 0x9000, scoped, tag = 'internal scratch']
  %s0 = inlined_call_operand.vmem [shape: bf16[2,8,256], index: 0, kind: input, shape index: {}]
  %s1 = inlined_call_operand.vmem [shape: bf16[16,8], index: 1, kind: input, shape index: {}]
  %s2 = inlined_call_operand.vmem [shape: bf16[32,16], index: 2, kind: input, shape index: {}]
  %s3 = inlined_call_operand.vmem [shape: bf16[64,32], index: 3, kind: input, shape index: {}]
  %s4 = inlined_call_operand.vmem [shape: f32[2,64,256], index: 4, kind: output, shape index: {}]
  %s5 = sld [smem:[#allocation0]]
  $region49: #{a_call__.1} parent=0
    _
  %s7 = ssub.s32 1, %s5
  %s8 = scalar_select 0, %s7, %s5
  loop: start=0, step=1, limit=4
  $region2: #{a_call__.1} parent=0 // loop_pre_header
    _
  $region3: #{a_call__.1} parent=0 // loop_header
    %s10 = sphi 0, %s14
    %p11 = scmp.ge.s32.totalorder %s10, 4
    %s17 = sphi 0, %s29
    %s18 = sphi 0, %s25
    %s19 = sphi 0, %s17
    %s20 = sphi 0, %s18
    %s21 = sphi 0, %s19
    %s22 = sphi 0, %s20
    %s34 = sphi 0, %s36
    %s37 = sphi 0, %s34
    %s38 = sphi 0, %s37
    %s54 = sphi 0, %s38
    %s58 = sphi 0, %s58
    %s60 = sphi 0, %s58
    %s61 = sphi 0, %s60
    %s75 = sphi 0, %s61
    %s79 = sphi 0, %s79
    %s81 = sphi 0, %s79
    %s82 = sphi 0, %s81
    %s96 = sphi 0, %s82
    %s100 = sphi 0, %s100
    %s102 = sphi 0, %s100
    %s103 = sphi 0, %s102
    %s117 = sphi 0, %s103
    %s125 = sphi 0, %s127
    %s128 = sphi 0, %s125
    %s129 = sphi 0, %s128
    %s145 = sphi 0, %s129
  $region4: #{a_call__.1} parent=0 // loop_header_branch
    %13 = sbr.rel (%p11) target = $region8
  $region5: #{a_call__.1} parent=0 // loop_body
    %s15 = ssub.s32 %s10, 1
    %s16 = ssub.s32 %s10, 2
    %s23 = sadd.s32 1, %s18
    %p24 = scmp.ge.s32.totalorder %s23, 1
    %s25 = scalar_select %p24, 0, %s23
    %s26 = sadd.s32 1, %s17
    %s27 = scalar_select %p24, %s26, %s17
    %p28 = scmp.ge.s32.totalorder %s27, 2
    %s29 = scalar_select %p28, 0, %s27
    %s30 = ssub.s32 %s17, %s29
    %s31 = ssub.s32 %s18, %s25
    %s32 = sor.u32 %s30, %s31
    %p33 = scmp.eq.s32.totalorder %s32, 0
    %s35 = sadd.s32 %s34, 1
    %s36 = scalar_select %p33, %s34, %s35
    %p39 = pneg %p33
    %p40 = scmp.eq.s32.totalorder %s10, 1
    %p41 = por %p39, %p40
    %p42 = scmp.ne.s32.totalorder %s34, %s37
    %p43 = scmp.eq.s32.totalorder %s10, 0
    %p44 = por %p42, %p43
    %p45 = scmp.ne.s32.totalorder %s34, %s37
    %p46 = scmp.eq.s32.totalorder %s15, 1
    %p47 = por %p45, %p46
    %p48 = scmp.ne.s32.totalorder %s37, %s38
    %p49 = scmp.eq.s32.totalorder %s15, 0
    %p50 = por %p48, %p49
    %p51 = scmp.ne.s32.totalorder %s37, %s38
    %p52 = scmp.eq.s32.totalorder %s16, 1
    %p53 = por %p51, %p52
    %p55 = scmp.ne.s32.totalorder %s38, %s54
    %p56 = scmp.eq.s32.totalorder %s16, 0
    %p57 = por %p55, %p56
    %s59 = sadd.s32 %s58, 1
    %p62 = scmp.eq.s32.totalorder %s10, 1
    %p63 = scmp.ne.s32.totalorder %s58, %s60
    %p64 = scmp.eq.s32.totalorder %s10, 0
    %p65 = por %p63, %p64
    %p66 = scmp.ne.s32.totalorder %s58, %s60
    %p67 = scmp.eq.s32.totalorder %s15, 1
    %p68 = por %p66, %p67
    %p69 = scmp.ne.s32.totalorder %s60, %s61
    %p70 = scmp.eq.s32.totalorder %s15, 0
    %p71 = por %p69, %p70
    %p72 = scmp.ne.s32.totalorder %s60, %s61
    %p73 = scmp.eq.s32.totalorder %s16, 1
    %p74 = por %p72, %p73
    %p76 = scmp.ne.s32.totalorder %s61, %s75
    %p77 = scmp.eq.s32.totalorder %s16, 0
    %p78 = por %p76, %p77
    %s80 = sadd.s32 %s79, 1
    %p83 = scmp.eq.s32.totalorder %s10, 1
    %p84 = scmp.ne.s32.totalorder %s79, %s81
    %p85 = scmp.eq.s32.totalorder %s10, 0
    %p86 = por %p84, %p85
    %p87 = scmp.ne.s32.totalorder %s79, %s81
    %p88 = scmp.eq.s32.totalorder %s15, 1
    %p89 = por %p87, %p88
    %p90 = scmp.ne.s32.totalorder %s81, %s82
    %p91 = scmp.eq.s32.totalorder %s15, 0
    %p92 = por %p90, %p91
    %p93 = scmp.ne.s32.totalorder %s81, %s82
    %p94 = scmp.eq.s32.totalorder %s16, 1
    %p95 = por %p93, %p94
    %p97 = scmp.ne.s32.totalorder %s82, %s96
    %p98 = scmp.eq.s32.totalorder %s16, 0
    %p99 = por %p97, %p98
    %s101 = sadd.s32 %s100, 1
    %p104 = scmp.eq.s32.totalorder %s10, 1
    %p105 = scmp.ne.s32.totalorder %s100, %s102
    %p106 = scmp.eq.s32.totalorder %s10, 0
    %p107 = por %p105, %p106
    %p108 = scmp.ne.s32.totalorder %s100, %s102
    %p109 = scmp.eq.s32.totalorder %s15, 1
    %p110 = por %p108, %p109
    %p111 = scmp.ne.s32.totalorder %s102, %s103
    %p112 = scmp.eq.s32.totalorder %s15, 0
    %p113 = por %p111, %p112
    %p114 = scmp.ne.s32.totalorder %s102, %s103
    %p115 = scmp.eq.s32.totalorder %s16, 1
    %p116 = por %p114, %p115
    %p118 = scmp.ne.s32.totalorder %s103, %s117
    %p119 = scmp.eq.s32.totalorder %s16, 0
    %p120 = por %p118, %p119
    %s121 = ssub.s32 %s17, %s29
    %s122 = ssub.s32 %s18, %s25
    %s123 = sor.u32 %s121, %s122
    %p124 = scmp.eq.s32.totalorder %s123, 0
    %s126 = sadd.s32 %s125, 1
    %s127 = scalar_select %p124, %s125, %s126
    %p130 = pneg %p124
    %p131 = scmp.eq.s32.totalorder %s10, 1
    %p132 = por %p130, %p131
    %p133 = scmp.ne.s32.totalorder %s125, %s128
    %p134 = scmp.eq.s32.totalorder %s10, 0
    %p135 = por %p133, %p134
    %p136 = scmp.ne.s32.totalorder %s125, %s128
    %p137 = scmp.eq.s32.totalorder %s15, 1
    %p138 = por %p136, %p137
    %p139 = scmp.ne.s32.totalorder %s128, %s129
    %p140 = scmp.eq.s32.totalorder %s15, 0
    %p141 = por %p139, %p140
    %p142 = scmp.ne.s32.totalorder %s128, %s129
    %p143 = scmp.eq.s32.totalorder %s16, 1
    %p144 = por %p142, %p143
    %p146 = scmp.ne.s32.totalorder %s129, %s145
    %p147 = scmp.eq.s32.totalorder %s16, 0
    %p148 = por %p146, %p147
    %p149 = scmp.le.s32.totalorder 1, %s10
    %p150 = scmp.lt.s32.totalorder %s10, 3
    %p151 = pnand %p149, %p150
    %p152 = pneg %p151
    // Predicated region
    $region9: #{a_call__.1} parent=5 // pred_check
      _
    $region10: #{a_call__.1} parent=5 // pred_check_branch
      %154 = sbr.rel (%p151) target = $region12
    $region11: #{a_call__.1} parent=5 // pred_region
      %s155 = ssub.s32 %s10, 1
      // Predicated region
      $region13: #{a_call__.1} parent=11 // pred_check
        %p156 = pneg %p71
      $region14: #{a_call__.1} parent=11 // pred_check_branch
        %158 = sbr.rel (%p156) target = $region16
      $region15: #{a_call__.1} parent=11 // pred_region
        _
      $region16: #{a_call__.1} parent=11 // pred_fallthru
        _
      // Predicated region
      $region17: #{a_call__.1} parent=11 // pred_check
        %p159 = pneg %p92
      $region18: #{a_call__.1} parent=11 // pred_check_branch
        %161 = sbr.rel (%p159) target = $region20
      $region19: #{a_call__.1} parent=11 // pred_region
        _
      $region20: #{a_call__.1} parent=11 // pred_fallthru
        _
      // Predicated region
      $region21: #{a_call__.1} parent=11 // pred_check
        %p162 = pneg %p113
      $region22: #{a_call__.1} parent=11 // pred_check_branch
        %164 = sbr.rel (%p162) target = $region24
      $region23: #{a_call__.1} parent=11 // pred_region
        _
      $region24: #{a_call__.1} parent=11 // pred_fallthru
        _
    $region12: #{a_call__.1} parent=5 // pred_fallthru
      _
    %p165 = scmp.lt.s32.totalorder %s10, 2
    // Predicated region
    $region25: #{a_call__.1} parent=5 // pred_check
      %p166 = pneg %p165
    $region26: #{a_call__.1} parent=5 // pred_check_branch
      %168 = sbr.rel (%p166) target = $region28
    $region27: #{a_call__.1} parent=5 // pred_region
      // Predicated region
      $region29: #{a_call__.1} parent=27 // pred_check
        %p169 = pneg %p44
      $region30: #{a_call__.1} parent=27 // pred_check_branch
        %171 = sbr.rel (%p169) target = $region32
      $region31: #{a_call__.1} parent=27 // pred_region
        %s172 = smul.u32 2, %s18
        %p173 = scmp.lt.s32.totalorder %s17, 1
        %s174 = scalar_select %p173, %s17, 1
        %p175 = scmp.lt.s32.totalorder %s172, 1
        %s176 = scalar_select %p175, %s172, 1
        %s177 = smul.addr %s174, 2
        %s178 = sadd.s32 %s176, %s177
        %s179 = smul.addr %s178, 4
        %s180 = scalar_lea.vmem %s0, %s179
        %s181 = smul.u32 2, %s18
      $region32: #{a_call__.1} parent=27 // pred_fallthru
        _
    $region28: #{a_call__.1} parent=5 // pred_fallthru
      _
    %p182 = scmp.le.s32.totalorder 1, %s10
    %p183 = scmp.lt.s32.totalorder %s10, 3
    %p184 = pnand %p182, %p183
    %p185 = pneg %p184
    // Predicated region
    $region33: #{a_call__.1} parent=5 // pred_check
      _
    $region34: #{a_call__.1} parent=5 // pred_check_branch
      %187 = sbr.rel (%p184) target = $region36
    $region35: #{a_call__.1} parent=5 // pred_region
      %s188 = ssub.s32 %s10, 1
      %s189 = smul.u32 2, %s20
      %p190 = scmp.lt.s32.totalorder %s19, 1
      %s191 = scalar_select %p190, %s19, 1
      %p192 = scmp.lt.s32.totalorder %s189, 1
      %s193 = scalar_select %p192, %s189, 1
      %s194 = smul.addr %s191, 2
      %s195 = sadd.s32 %s193, %s194
      %s196 = smul.addr %s195, 4
      %s197 = scalar_lea.vmem %s0, %s196
      %p198 = pneg %p50
      %p199 = pneg %p47
      %p200 = pneg %p71
      %p201 = pneg %p68
      %p202 = pneg %p92
      %p203 = pneg %p89
      %p204 = pneg %p113
      %p205 = pneg %p110
      %p206 = pneg %p141
      %p207 = pneg %p138
      %s208 = smul.u32 2, %s20
      %p209 = scmp.lt.s32.totalorder %s19, 1
      %s210 = scalar_select %p209, %s19, 1
      %p211 = scmp.lt.s32.totalorder %s208, 1
      %s212 = scalar_select %p211, %s208, 1
      %s213 = smul.addr %s210, 16
      %s214 = sadd.s32 %s212, %s213
      %s215 = smul.addr %s214, 8
      %s216 = scalar_lea.vmem %s4, %s215
      %s217 = smul.u32 2, %s20
      %p218 = scmp.lt.s32.totalorder %s19, 1
      %s219 = scalar_select %p218, %s19, 1
      %p220 = scmp.lt.s32.totalorder %s217, 1
      %s221 = scalar_select %p220, %s217, 1
      %s222 = smul.addr %s219, 2
      %s223 = sadd.s32 %s221, %s222
      %s224 = smul.addr %s223, 4
      %s225 = scalar_lea.vmem %s0, %s224
      %s226 = smul.u32 2, %s20
      %s227 = smul.u32 2, %s20
      %p228 = scmp.lt.s32.totalorder %s19, 1
      %s229 = scalar_select %p228, %s19, 1
      %p230 = scmp.lt.s32.totalorder %s227, 1
      %s231 = scalar_select %p230, %s227, 1
      %s232 = smul.addr %s229, 16
      %s233 = sadd.s32 %s231, %s232
      %s234 = smul.addr %s233, 8
      %s235 = scalar_lea.vmem %s4, %s234
      %s236 = smul.u32 2, %s20
      %v238 = vld [vmem:[%s1] sm:$0xf]
      %v239 = vld [vmem:[%s1 + $0x4] sm:$0xf]
      %v240 = vld [vmem:[%s225] sm:$0xff]
      %v243 = vunpack.c.l.b16 %v238
      %v244 = vunpack.c.l.b16 %v239
      %v245 = vpack.c.b16 %v244, %v243
      %v247 = vunpack.c.l.b16 %v240
      %v248 = vunpack.c.h.b16 %v240
      %v249 = vpack.c.b16 %v247, %v247
      %v250 = vpack.c.b16 %v248, %v248
      %vm251 = vcmask 64512
      %v253 = vsel %vm251, %v245, 0
      %vm255 = vcmask 1043456
      %v257 = vsel %vm255, %v249, 0
      %v260 = vsel %vm255, %v250, 0
      %262 = vmatpush.bf16.msra.mxu0 0
      %263 = vmatpush.bf16.msra.mxu0 0
      %264 = vmatpush.bf16.msra.mxu0 0
      %265 = vmatpush.bf16.msra.mxu0 0
      %266 = vmatpush.bf16.msra.mxu0 0
      %267 = vmatpush.bf16.msra.mxu0 0
      %268 = vmatpush.bf16.msra.mxu0 0
      %269 = vmatpush.bf16.msra.mxu0 %v257
      %270 = vmatmul.bf16.gmra.mxu0 %v253
      %v271 = vpop.f32.mrf.mxu0
      %v272 = vadd.f32 0.0, %v271
      %v273 = vpop.f32.mrf.mxu0
      %v274 = vadd.f32 0.0, %v273
      %275 = vdwg.mxu0
      %276 = vmatpush.bf16.msra.mxu0 0
      %277 = vmatpush.bf16.msra.mxu0 0
      %278 = vmatpush.bf16.msra.mxu0 0
      %279 = vmatpush.bf16.msra.mxu0 0
      %280 = vmatpush.bf16.msra.mxu0 0
      %281 = vmatpush.bf16.msra.mxu0 0
      %282 = vmatpush.bf16.msra.mxu0 0
      %283 = vmatpush.bf16.msra.mxu0 %v260
      %284 = vmatmul.bf16.gmra.mxu0 %v253
      %v285 = vpop.f32.mrf.mxu0
      %v286 = vadd.f32 0.0, %v285
      %v287 = vpop.f32.mrf.mxu0
      %v288 = vadd.f32 0.0, %v287
      %289 = vdwg.mxu0
      %v290 = vmax.f32 %v272, 0.0
      %v291 = vmax.f32 %v286, 0.0
      %v292 = vmax.f32 %v274, 0.0
      %v293 = vmax.f32 %v288, 0.0
      %v294 = vld [vmem:[%s2] sm:$0xf]
      %v295 = vld [vmem:[%s2 + $0x4] sm:$0xf]
      %v296 = vld [vmem:[%s2 + $0x8] sm:$0xf]
      %v297 = vld [vmem:[%s2 + $0xc] sm:$0xf]
      %v298 = vpack.c.bf16 %v292, %v290
      %v299 = vpack.c.bf16 %v293, %v291
      %v304 = vunpack.c.l.b16 %v294
      %v305 = vunpack.c.l.b16 %v295
      %v306 = vunpack.c.l.b16 %v296
      %v307 = vunpack.c.l.b16 %v297
      %v308 = vpack.c.b16 %v305, %v304
      %v309 = vpack.c.b16 %v307, %v306
      %vm310 = vcmask 130048
      %v312 = vsel %vm310, %v308, 0
      %v315 = vsel %vm310, %v309, 0
      %317 = vmatpush.bf16.msra.mxu0 0
      %318 = vmatpush.bf16.msra.mxu0 0
      %319 = vmatpush.bf16.msra.mxu0 0
      %320 = vmatpush.bf16.msra.mxu0 0
      %321 = vmatpush.bf16.msra.mxu0 0
      %322 = vmatpush.bf16.msra.mxu0 0
      %323 = vmatpush.bf16.msra.mxu0 0
      %324 = vmatpush.bf16.msra.mxu0 %v298
      %325 = vmatmul.bf16.gmra.mxu0 %v312
      %v326 = vpop.f32.mrf.mxu0
      %v327 = vadd.f32 0.0, %v326
      %v328 = vpop.f32.mrf.mxu0
      %v329 = vadd.f32 0.0, %v328
      %330 = vmatmul.bf16.gmra.mxu0 %v315
      %v331 = vpop.f32.mrf.mxu0
      %v332 = vadd.f32 0.0, %v331
      %v333 = vpop.f32.mrf.mxu0
      %v334 = vadd.f32 0.0, %v333
      %335 = vdwg.mxu0
      %336 = vmatpush.bf16.msra.mxu0 0
      %337 = vmatpush.bf16.msra.mxu0 0
      %338 = vmatpush.bf16.msra.mxu0 0
      %339 = vmatpush.bf16.msra.mxu0 0
      %340 = vmatpush.bf16.msra.mxu0 0
      %341 = vmatpush.bf16.msra.mxu0 0
      %342 = vmatpush.bf16.msra.mxu0 0
      %343 = vmatpush.bf16.msra.mxu0 %v299
      %344 = vmatmul.bf16.gmra.mxu0 %v312
      %v345 = vpop.f32.mrf.mxu0
      %v346 = vadd.f32 0.0, %v345
      %v347 = vpop.f32.mrf.mxu0
      %v348 = vadd.f32 0.0, %v347
      %349 = vmatmul.bf16.gmra.mxu0 %v315
      %v350 = vpop.f32.mrf.mxu0
      %v351 = vadd.f32 0.0, %v350
      %v352 = vpop.f32.mrf.mxu0
      %v353 = vadd.f32 0.0, %v352
      %354 = vdwg.mxu0
      %v355 = vmax.f32 %v327, 0.0
      %v356 = vmax.f32 %v346, 0.0
      %v357 = vmax.f32 %v329, 0.0
      %v358 = vmax.f32 %v348, 0.0
      %v359 = vmax.f32 %v332, 0.0
      %v360 = vmax.f32 %v351, 0.0
      %v361 = vmax.f32 %v334, 0.0
      %v362 = vmax.f32 %v353, 0.0
      %v363 = vld [vmem:[%s3] sm:$0xf]
      %v364 = vld [vmem:[%s3 + $0x4] sm:$0xf]
      %v365 = vld [vmem:[%s3 + $0x8] sm:$0xf]
      %v366 = vld [vmem:[%s3 + $0xc] sm:$0xf]
      %v367 = vld [vmem:[%s3 + $0x10] sm:$0xf]
      %v368 = vld [vmem:[%s3 + $0x14] sm:$0xf]
      %v369 = vld [vmem:[%s3 + $0x18] sm:$0xf]
      %v370 = vld [vmem:[%s3 + $0x1c] sm:$0xf]
      %v371 = vpack.c.bf16 %v357, %v355
      %v372 = vpack.c.bf16 %v358, %v356
      %v373 = vpack.c.bf16 %v361, %v359
      %v374 = vpack.c.bf16 %v362, %v360
      %v383 = vunpack.c.l.b16 %v363
      %v384 = vunpack.c.l.b16 %v364
      %v385 = vunpack.c.l.b16 %v365
      %v386 = vunpack.c.l.b16 %v366
      %v387 = vunpack.c.l.b16 %v367
      %v388 = vunpack.c.l.b16 %v368
      %v389 = vunpack.c.l.b16 %v369
      %v390 = vunpack.c.l.b16 %v370
      %v391 = vpack.c.b16 %v384, %v383
      %v392 = vpack.c.b16 %v386, %v385
      %v393 = vpack.c.b16 %v388, %v387
      %v394 = vpack.c.b16 %v390, %v389
      %vm395 = vcmask 261120
      %v397 = vsel %vm395, %v391, 0
      %v400 = vsel %vm395, %v392, 0
      %v403 = vsel %vm395, %v393, 0
      %v406 = vsel %vm395, %v394, 0
      %408 = vmatpush.bf16.msra.mxu0 0
      %409 = vmatpush.bf16.msra.mxu0 0
      %410 = vmatpush.bf16.msra.mxu0 0
      %411 = vmatpush.bf16.msra.mxu0 0
      %412 = vmatpush.bf16.msra.mxu0 0
      %413 = vmatpush.bf16.msra.mxu0 0
      %414 = vmatpush.bf16.msra.mxu0 %v373
      %415 = vmatpush.bf16.msra.mxu0 %v371
      %416 = vmatmul.bf16.gmra.mxu0 %v397
      %v417 = vpop.f32.mrf.mxu0
      %v418 = vadd.f32 0.0, %v417
      %v419 = vpop.f32.mrf.mxu0
      %v420 = vadd.f32 0.0, %v419
      %421 = vmatmul.bf16.gmra.mxu0 %v400
      %v422 = vpop.f32.mrf.mxu0
      %v423 = vadd.f32 0.0, %v422
      %v424 = vpop.f32.mrf.mxu0
      %v425 = vadd.f32 0.0, %v424
      %426 = vmatmul.bf16.gmra.mxu0 %v403
      %v427 = vpop.f32.mrf.mxu0
      %v428 = vadd.f32 0.0, %v427
      %v429 = vpop.f32.mrf.mxu0
      %v430 = vadd.f32 0.0, %v429
      %431 = vmatmul.bf16.gmra.mxu0 %v406
      %v432 = vpop.f32.mrf.mxu0
      %v433 = vadd.f32 0.0, %v432
      %v434 = vpop.f32.mrf.mxu0
      %v435 = vadd.f32 0.0, %v434
      %436 = vdwg.mxu0
      %437 = vmatpush.bf16.msra.mxu0 0
      %438 = vmatpush.bf16.msra.mxu0 0
      %439 = vmatpush.bf16.msra.mxu0 0
      %440 = vmatpush.bf16.msra.mxu0 0
      %441 = vmatpush.bf16.msra.mxu0 0
      %442 = vmatpush.bf16.msra.mxu0 0
      %443 = vmatpush.bf16.msra.mxu0 %v374
      %444 = vmatpush.bf16.msra.mxu0 %v372
      %445 = vmatmul.bf16.gmra.mxu0 %v397
      %v446 = vpop.f32.mrf.mxu0
      %v447 = vadd.f32 0.0, %v446
      %v448 = vpop.f32.mrf.mxu0
      %v449 = vadd.f32 0.0, %v448
      %450 = vmatmul.bf16.gmra.mxu0 %v400
      %v451 = vpop.f32.mrf.mxu0
      %v452 = vadd.f32 0.0, %v451
      %v453 = vpop.f32.mrf.mxu0
      %v454 = vadd.f32 0.0, %v453
      %455 = vmatmul.bf16.gmra.mxu0 %v403
      %v456 = vpop.f32.mrf.mxu0
      %v457 = vadd.f32 0.0, %v456
      %v458 = vpop.f32.mrf.mxu0
      %v459 = vadd.f32 0.0, %v458
      %460 = vmatmul.bf16.gmra.mxu0 %v406
      %v461 = vpop.f32.mrf.mxu0
      %v462 = vadd.f32 0.0, %v461
      %v463 = vpop.f32.mrf.mxu0
      %v464 = vadd.f32 0.0, %v463
      %465 = vdwg.mxu0
      %v466 = vmax.f32 %v418, 0.0
      %v467 = vmax.f32 %v447, 0.0
      %v468 = vmax.f32 %v420, 0.0
      %v469 = vmax.f32 %v449, 0.0
      %v470 = vmax.f32 %v423, 0.0
      %v471 = vmax.f32 %v452, 0.0
      %v472 = vmax.f32 %v425, 0.0
      %v473 = vmax.f32 %v454, 0.0
      %v474 = vmax.f32 %v428, 0.0
      %v475 = vmax.f32 %v457, 0.0
      %v476 = vmax.f32 %v430, 0.0
      %v477 = vmax.f32 %v459, 0.0
      %v478 = vmax.f32 %v433, 0.0
      %v479 = vmax.f32 %v462, 0.0
      %v480 = vmax.f32 %v435, 0.0
      %v481 = vmax.f32 %v464, 0.0
      %482 = vst [vmem:[%s235] sm:$0xff] %v466
      %483 = vst [vmem:[%s235 + $0x8] sm:$0xff] %v467
      %484 = vst [vmem:[%s235 + $0x10] sm:$0xff] %v468
      %485 = vst [vmem:[%s235 + $0x18] sm:$0xff] %v469
      %486 = vst [vmem:[%s235 + $0x20] sm:$0xff] %v470
      %487 = vst [vmem:[%s235 + $0x28] sm:$0xff] %v471
      %488 = vst [vmem:[%s235 + $0x30] sm:$0xff] %v472
      %489 = vst [vmem:[%s235 + $0x38] sm:$0xff] %v473
      %490 = vst [vmem:[%s235 + $0x40] sm:$0xff] %v474
      %491 = vst [vmem:[%s235 + $0x48] sm:$0xff] %v475
      %492 = vst [vmem:[%s235 + $0x50] sm:$0xff] %v476
      %493 = vst [vmem:[%s235 + $0x58] sm:$0xff] %v477
      %494 = vst [vmem:[%s235 + $0x60] sm:$0xff] %v478
      %495 = vst [vmem:[%s235 + $0x68] sm:$0xff] %v479
      %496 = vst [vmem:[%s235 + $0x70] sm:$0xff] %v480
      %497 = vst [vmem:[%s235 + $0x78] sm:$0xff] %v481
      %s498 = smul.u32 2, %s20
      %p499 = scmp.lt.s32.totalorder %s19, 1
      %s500 = scalar_select %p499, %s19, 1
      %p501 = scmp.lt.s32.totalorder %s498, 1
      %s502 = scalar_select %p501, %s498, 1
      %s503 = smul.addr %s500, 16
      %s504 = sadd.s32 %s502, %s503
      %s505 = smul.addr %s504, 8
      %s506 = scalar_lea.vmem %s4, %s505
      // Predicated region
      $region37: #{a_call__.1} parent=35 // pred_check
        %p507 = pneg %p138
      $region38: #{a_call__.1} parent=35 // pred_check_branch
        %509 = sbr.rel (%p507) target = $region40
      $region39: #{a_call__.1} parent=35 // pred_region
        %s510 = smul.u32 2, %s20
      $region40: #{a_call__.1} parent=35 // pred_fallthru
        _
    $region36: #{a_call__.1} parent=5 // pred_fallthru
      _
    %p511 = scmp.le.s32.totalorder 2, %s10
    // Predicated region
    $region41: #{a_call__.1} parent=5 // pred_check
      %p512 = pneg %p511
    $region42: #{a_call__.1} parent=5 // pred_check_branch
      %514 = sbr.rel (%p512) target = $region44
    $region43: #{a_call__.1} parent=5 // pred_region
      %s515 = ssub.s32 %s10, 2
      // Predicated region
      $region45: #{a_call__.1} parent=43 // pred_check
        %p516 = pneg %p144
      $region46: #{a_call__.1} parent=43 // pred_check_branch
        %518 = sbr.rel (%p516) target = $region48
      $region47: #{a_call__.1} parent=43 // pred_region
        %s519 = smul.u32 2, %s22
        %p520 = scmp.lt.s32.totalorder %s21, 1
        %s521 = scalar_select %p520, %s21, 1
        %p522 = scmp.lt.s32.totalorder %s519, 1
        %s523 = scalar_select %p522, %s519, 1
        %s524 = smul.addr %s521, 16
        %s525 = sadd.s32 %s523, %s524
        %s526 = smul.addr %s525, 8
        %s527 = scalar_lea.vmem %s4, %s526
      $region48: #{a_call__.1} parent=43 // pred_fallthru
        _
    $region44: #{a_call__.1} parent=5 // pred_fallthru
      _
  $region6: #{a_call__.1} parent=0 // loop_footer
    %s14 = sadd.s32 1, %s10
  $region7: #{a_call__.1} parent=0 // loop_footer_branch
    %9 = sbr.rel target = $region3
  $region8: #{a_call__.1} parent=0 // loop_exit
    _

</llo_original>
